<compile_context>
chip_gen: v7x
topology: tpu7x:2x2x1
jax: 0.10.0
libtpu: 0.0.40
codegen_flags: <defaults>
</compile_context>

<pallas_src>
from functools import partial

import jax
import jax.numpy as jnp
from jax import lax
from jax.experimental import pallas as pl
from jax.experimental.pallas import tpu as pltpu

EPS = 1e-5
MOMENTUM = 0.997
LANE = 128
SUBLANE = 8


def _switchnorm1d_kernel(sw_ref, x_ref, mb_ref, vb_ref, w_ref, b_ref, o_ref,
                         *, num_features: int, eps: float):
    # sw_ref : SMEM (2,) f32 = [softmax(mean_weight)[0], softmax(var_weight)[0]]
    # x_ref  : VMEM (TILE_N, C_pad)   (features zero-padded past num_features)
    # mb_ref : VMEM (1, C_pad) f32 = softmax(mean_weight)[1] * mean_bn
    # vb_ref : VMEM (1, C_pad) f32 = softmax(var_weight)[1]  * var_bn
    # w_ref / b_ref : VMEM (1, C_pad) f32 (pre-cast in wrapper)
    x = x_ref[...].astype(jnp.float32)
    c = num_features

    # ---- single-pass layer-norm statistics over the (true) feature axis ----
    # Padded columns are zero, so padded-row sums equal the true sums.  (A
    # centered two-pass variance would be corrupted by the pad columns.)
    row_sum = jnp.sum(x, axis=1, keepdims=True)          # (T, 1)
    row_sumsq = jnp.sum(x * x, axis=1, keepdims=True)    # (T, 1)
    mean_ln = row_sum * (1.0 / c)
    # unbiased variance (matches torch.Tensor.var default, ddof=1)
    var_ln = (row_sumsq - row_sum * mean_ln) * (1.0 / (c - 1))

    # ---- fused switchable normalization (no (T, C) mean/var temporaries) ---
    inv_std = lax.rsqrt(sw_ref[1] * var_ln + vb_ref[...] + eps)   # (T, C_pad)
    x_hat = (x - sw_ref[0] * mean_ln - mb_ref[...]) * inv_std
    o_ref[...] = (x_hat * w_ref[...] + b_ref[...]).astype(o_ref.dtype)


def _pad2d(a, rows, cols):
    pr = rows - a.shape[0]
    pc = cols - a.shape[1]
    if pr == 0 and pc == 0:
        return a
    return jnp.pad(a, ((0, pr), (0, pc)))


def switch_norm_1d(x, weight, bias, mean_weight, var_weight,
                   running_mean, running_var,
                   training=True, momentum=MOMENTUM,
                   using_moving_average=True, eps=EPS):
    """Pallas SwitchNorm1d forward. Returns (y, new_running_mean, new_running_var)."""
    n, c = x.shape
    if c < 2:
        raise ValueError("SwitchNorm1d requires num_features >= 2 (unbiased LN variance).")

    f32 = jnp.float32
    mw = jax.nn.softmax(mean_weight.astype(f32))
    vw = jax.nn.softmax(var_weight.astype(f32))

    # Batch-norm statistics (axis 0): computed once here and shared between the
    # running-stat update and the kernel (not recomputed inside the kernel).
    if training:
        xf = x.astype(f32)
        mean_bn = jnp.mean(xf, axis=0, keepdims=True)            # (1, C)
        var_bn = jnp.var(xf, axis=0, keepdims=True, ddof=1)      # (1, C)
    else:
        mean_bn = running_mean.astype(f32)
        var_bn = running_var.astype(f32)

    # Pre-scale the per-feature (1, C) terms so the kernel only needs 2 scalars.
    mb = mw[1] * mean_bn
    vb = vw[1] * var_bn
    sw = jnp.stack([mw[0], vw[0]]).astype(f32)                   # (2,) -> SMEM

    # ---- pad to lane/sublane-aligned shapes (lane-dense, unmasked stores) --
    c_pad = ((c + LANE - 1) // LANE) * LANE
    n_pad = ((n + SUBLANE - 1) // SUBLANE) * SUBLANE
    x_p = _pad2d(x, n_pad, c_pad)
    mb_p = _pad2d(mb, 1, c_pad)
    vb_p = _pad2d(vb, 1, c_pad)
    w_p = _pad2d(weight.astype(f32), 1, c_pad)
    b_p = _pad2d(bias.astype(f32), 1, c_pad)

    # ---- batch tile: large enough to amortize per-step overhead (~0.35 us),
    #      small enough that double-buffered in + out tiles stay well inside
    #      the scoped VMEM budget on v5e/v6e/v7x (~4 MiB per tile target). ----
    bytes_per_row = c_pad * 4
    tile_n = max(SUBLANE, min(1024, (4 * 1024 * 1024) // bytes_per_row))
    tile_n = (tile_n // SUBLANE) * SUBLANE
    tile_n = min(tile_n, n_pad)
    grid = (pl.cdiv(n_pad, tile_n),)

    row_spec = pl.BlockSpec((tile_n, c_pad), lambda i, sw_ref: (i, 0))
    par_spec = pl.BlockSpec((1, c_pad), lambda i, sw_ref: (0, 0))  # resident

    y_p = pl.pallas_call(
        partial(_switchnorm1d_kernel, num_features=c, eps=eps),
        out_shape=jax.ShapeDtypeStruct((n_pad, c_pad), x.dtype),
        grid_spec=pltpu.PrefetchScalarGridSpec(
            num_scalar_prefetch=1,
            grid=grid,
            in_specs=[row_spec, par_spec, par_spec, par_spec, par_spec],
            out_specs=row_spec,
        ),
        compiler_params=pltpu.CompilerParams(
            dimension_semantics=("parallel",)),
    )(sw, x_p, mb_p, vb_p, w_p, b_p)

    y = y_p[:n, :c] if (c_pad != c or n_pad != n) else y_p

    # ---- running-stat side effect (does not feed y), matching the module ----
    # TODO(synk): PyTorch mutates the buffers in place; here the updated
    # buffers are returned instead of mutated.
    if training:
        if using_moving_average:
            new_rm = momentum * running_mean + (1.0 - momentum) * mean_bn
            new_rv = momentum * running_var + (1.0 - momentum) * var_bn
        else:
            new_rm = running_mean + mean_bn
            new_rv = running_var + mean_bn ** 2 + var_bn
    else:
        new_rm, new_rv = running_mean, running_var
    return (y,
            new_rm.astype(running_mean.dtype),
            new_rv.astype(running_var.dtype))


def _reference(x, weight, bias, mean_weight, var_weight):
    # Pure-JAX reference of the PyTorch forward (training mode).
    mean_ln = jnp.mean(x, axis=1, keepdims=True)
    var_ln = jnp.var(x, axis=1, keepdims=True, ddof=1)
    mean_bn = jnp.mean(x, axis=0, keepdims=True)
    var_bn = jnp.var(x, axis=0, keepdims=True, ddof=1)
    mw = jax.nn.softmax(mean_weight)
    vw = jax.nn.softmax(var_weight)
    mean = mw[0] * mean_ln + mw[1] * mean_bn
    var = vw[0] * var_ln + vw[1] * var_bn
    xh = (x - mean) / jnp.sqrt(var + EPS)
    return xh * weight + bias


if __name__ == "__main__":
    key = jax.random.PRNGKey(0)
    N, C = 8, 32

    x = jax.random.normal(key, (N, C), dtype=jnp.float32)

    # Deterministic parameter init, matching nn.Module.__init__ / reset_parameters.
    weight = jnp.ones((1, C), jnp.float32)
    bias = jnp.zeros((1, C), jnp.float32)
    mean_weight = jnp.ones((2,), jnp.float32)
    var_weight = jnp.ones((2,), jnp.float32)
    running_mean = jnp.zeros((1, C), jnp.float32)
    running_var = jnp.zeros((1, C), jnp.float32)

    y, new_rm, new_rv = switch_norm_1d(
        x, weight, bias, mean_weight, var_weight,
        running_mean, running_var, training=True)
    jax.block_until_ready(y)

    y_ref = _reference(x, weight, bias, mean_weight, var_weight)
    assert y.shape == y_ref.shape, "shape mismatch vs reference"
    assert jnp.allclose(y, y_ref, atol=1e-5, rtol=1e-5), "mismatch vs reference"

    # Eval-mode smoke test (uses running stats as BN stats).
    y_eval, _, _ = switch_norm_1d(
        x, weight, bias, mean_weight, var_weight,
        new_rm, new_rv, training=False)
    jax.block_until_ready(y_eval)
    assert jnp.all(jnp.isfinite(y_eval)), "eval path produced non-finite values"

    print("KERNEL_OK")
</pallas_src>

<mosaic_0001>
module attributes {stable_mosaic.version = 11 : i64} {
  func.func @_switchnorm1d_kernel(%arg0: i32, %arg1: memref<2xf32, #tpu.memory_space<smem>>, %arg2: memref<8x128xf32, #tpu.memory_space<vmem>>, %arg3: memref<1x128xf32, #tpu.memory_space<vmem>>, %arg4: memref<1x128xf32, #tpu.memory_space<vmem>>, %arg5: memref<1x128xf32, #tpu.memory_space<vmem>>, %arg6: memref<1x128xf32, #tpu.memory_space<vmem>>, %arg7: memref<8x128xf32, #tpu.memory_space<vmem>>) attributes {dimension_semantics = [#tpu.dimension_semantics<parallel>], iteration_bounds = array<i64: 1>, scalar_prefetch = 1 : i64, scratch_operands = 0 : i64, tpu.core_type = #tpu.core_type<tc>, window_params = [{transform_indices = @transform_0, window_bounds = array<i64: 8, 128>}, {pipeline_mode = #tpu.pipeline_mode<synchronous>, transform_indices = @transform_1, window_bounds = array<i64: 1, 128>}, {pipeline_mode = #tpu.pipeline_mode<synchronous>, transform_indices = @transform_2, window_bounds = array<i64: 1, 128>}, {pipeline_mode = #tpu.pipeline_mode<synchronous>, transform_indices = @transform_3, window_bounds = array<i64: 1, 128>}, {pipeline_mode = #tpu.pipeline_mode<synchronous>, transform_indices = @transform_4, window_bounds = array<i64: 1, 128>}, {transform_indices = @transform_5, window_bounds = array<i64: 8, 128>}]} {
    %c0 = arith.constant 0 : index
    %c0_0 = arith.constant 0 : index
    %0 = vector.load %arg2[%c0, %c0_0] : memref<8x128xf32, #tpu.memory_space<vmem>>, vector<8x128xf32>
    %cst = arith.constant dense<0.000000e+00> : vector<8xf32>
    %1 = vector.multi_reduction <add>, %0, %cst [1] : vector<8x128xf32> to vector<8xf32>
    %2 = vector.shape_cast %1 : vector<8xf32> to vector<8x1xf32>
    %3 = arith.mulf %0, %0 : vector<8x128xf32>
    %cst_1 = arith.constant dense<0.000000e+00> : vector<8xf32>
    %4 = vector.multi_reduction <add>, %3, %cst_1 [1] : vector<8x128xf32> to vector<8xf32>
    %5 = vector.shape_cast %4 : vector<8xf32> to vector<8x1xf32>
    %cst_2 = arith.constant 3.125000e-02 : f32
    %6 = vector.broadcast %cst_2 : f32 to vector<8x1xf32>
    %7 = arith.mulf %2, %6 : vector<8x1xf32>
    %8 = arith.mulf %2, %7 : vector<8x1xf32>
    %9 = arith.subf %5, %8 : vector<8x1xf32>
    %cst_3 = arith.constant 0.0322580636 : f32
    %10 = vector.broadcast %cst_3 : f32 to vector<8x1xf32>
    %11 = arith.mulf %9, %10 : vector<8x1xf32>
    %c1 = arith.constant 1 : index
    %12 = memref.load %arg1[%c1] : memref<2xf32, #tpu.memory_space<smem>>
    %13 = vector.broadcast %12 : f32 to vector<8x1xf32>
    %14 = arith.mulf %13, %11 : vector<8x1xf32>
    %c0_4 = arith.constant 0 : index
    %c0_5 = arith.constant 0 : index
    %15 = vector.load %arg4[%c0_4, %c0_5] : memref<1x128xf32, #tpu.memory_space<vmem>>, vector<1x128xf32>
    %16 = vector.broadcast %14 : vector<8x1xf32> to vector<8x128xf32>
    %17 = vector.broadcast %15 : vector<1x128xf32> to vector<8x128xf32>
    %18 = arith.addf %16, %17 : vector<8x128xf32>
    %cst_6 = arith.constant 9.99999974E-6 : f32
    %19 = vector.broadcast %cst_6 : f32 to vector<8x128xf32>
    %20 = arith.addf %18, %19 : vector<8x128xf32>
    %21 = math.rsqrt %20 : vector<8x128xf32>
    %c0_7 = arith.constant 0 : index
    %22 = memref.load %arg1[%c0_7] : memref<2xf32, #tpu.memory_space<smem>>
    %23 = vector.broadcast %22 : f32 to vector<8x1xf32>
    %24 = arith.mulf %23, %7 : vector<8x1xf32>
    %25 = vector.broadcast %24 : vector<8x1xf32> to vector<8x128xf32>
    %26 = arith.subf %0, %25 : vector<8x128xf32>
    %c0_8 = arith.constant 0 : index
    %c0_9 = arith.constant 0 : index
    %27 = vector.load %arg3[%c0_8, %c0_9] : memref<1x128xf32, #tpu.memory_space<vmem>>, vector<1x128xf32>
    %28 = vector.broadcast %27 : vector<1x128xf32> to vector<8x128xf32>
    %29 = arith.subf %26, %28 : vector<8x128xf32>
    %30 = arith.mulf %29, %21 : vector<8x128xf32>
    %c0_10 = arith.constant 0 : index
    %c0_11 = arith.constant 0 : index
    %31 = vector.load %arg5[%c0_10, %c0_11] : memref<1x128xf32, #tpu.memory_space<vmem>>, vector<1x128xf32>
    %32 = vector.broadcast %31 : vector<1x128xf32> to vector<8x128xf32>
    %33 = arith.mulf %30, %32 : vector<8x128xf32>
    %c0_12 = arith.constant 0 : index
    %c0_13 = arith.constant 0 : index
    %34 = vector.load %arg6[%c0_12, %c0_13] : memref<1x128xf32, #tpu.memory_space<vmem>>, vector<1x128xf32>
    %35 = vector.broadcast %34 : vector<1x128xf32> to vector<8x128xf32>
    %36 = arith.addf %33, %35 : vector<8x128xf32>
    %c0_14 = arith.constant 0 : index
    %c0_15 = arith.constant 0 : index
    %37 = vector.load %arg7[%c0_14, %c0_15] : memref<8x128xf32, #tpu.memory_space<vmem>>, vector<8x128xf32>
    tpu.vector_store %arg7[%c0_14, %c0_15], %36 {strides = array<i32>} : memref<8x128xf32, #tpu.memory_space<vmem>>, vector<8x128xf32>,
    return
  }
  func.func @transform_0(%arg0: i32, %arg1: memref<2xf32, #tpu.memory_space<smem>>) -> (i32, i32) {
    %c0_i32 = arith.constant 0 : i32
    %c0_i32_0 = arith.constant 0 : i32
    return %arg0, %c0_i32 : i32, i32
  }
  func.func @transform_1(%arg0: i32, %arg1: memref<2xf32, #tpu.memory_space<smem>>) -> (i32, i32) {
    %c0_i32 = arith.constant 0 : i32
    %c0_i32_0 = arith.constant 0 : i32
    %c0_i32_1 = arith.constant 0 : i32
    return %c0_i32, %c0_i32_0 : i32, i32
  }
  func.func @transform_2(%arg0: i32, %arg1: memref<2xf32, #tpu.memory_space<smem>>) -> (i32, i32) {
    %c0_i32 = arith.constant 0 : i32
    %c0_i32_0 = arith.constant 0 : i32
    %c0_i32_1 = arith.constant 0 : i32
    return %c0_i32, %c0_i32_0 : i32, i32
  }
  func.func @transform_3(%arg0: i32, %arg1: memref<2xf32, #tpu.memory_space<smem>>) -> (i32, i32) {
    %c0_i32 = arith.constant 0 : i32
    %c0_i32_0 = arith.constant 0 : i32
    %c0_i32_1 = arith.constant 0 : i32
    return %c0_i32, %c0_i32_0 : i32, i32
  }
  func.func @transform_4(%arg0: i32, %arg1: memref<2xf32, #tpu.memory_space<smem>>) -> (i32, i32) {
    %c0_i32 = arith.constant 0 : i32
    %c0_i32_0 = arith.constant 0 : i32
    %c0_i32_1 = arith.constant 0 : i32
    return %c0_i32, %c0_i32_0 : i32, i32
  }
  func.func @transform_5(%arg0: i32, %arg1: memref<2xf32, #tpu.memory_space<smem>>) -> (i32, i32) {
    %c0_i32 = arith.constant 0 : i32
    %c0_i32_0 = arith.constant 0 : i32
    return %arg0, %c0_i32 : i32, i32
  }
}

</mosaic_0001>

<llo_original>
// kernel: tpu_custom_call.1
$region0: #{tpu_custom_call.1}
  #allocation0 [shape = 'u32[]', space=smem, size = 0x4, offset = 0x4, fixed_abs, tag = 'smem constant byte address 0x4 - core index']
  #allocation1 [shape = 'u32[144,128]{1,0:T(1,128)}', space=vmem, size = 0x12000, scoped, tag = 'internal scratch']
  #allocation2 [shape = 's32[1]{0}', space=sflag, size = 0x4, scoped, tag = 'scoped memory for tpu_custom_call.1']
  #allocation3 [shape = 'u8[512]{0}', space=smem, size = 0x200, scoped, tag = 'prefetched SMEM operand 0']
  %s0 = inlined_call_operand.hbm [shape: f32[2], index: 0, kind: input, shape index: {}]
  %s1 = inlined_call_operand.hbm [shape: f32[8,128], index: 1, kind: input, shape index: {}]
  %s2 = inlined_call_operand.vmem [shape: f32[1,128], index: 2, kind: input, shape index: {}]
  %s3 = inlined_call_operand.vmem [shape: f32[1,128], index: 3, kind: input, shape index: {}]
  %s4 = inlined_call_operand.vmem [shape: f32[1,128], index: 4, kind: input, shape index: {}]
  %s5 = inlined_call_operand.vmem [shape: f32[1,128], index: 5, kind: input, shape index: {}]
  %s6 = inlined_call_operand.hbm [shape: f32[8,128], index: 6, kind: output, shape index: {}]
  %s7 = sld [smem:[#allocation0]]
  $region34: #{tpu_custom_call.1} parent=0
    _
  %s9 = ssub.s32 1, %s7
  %s10 = scalar_select 0, %s9, %s7
  %12 = dma.hbm_to_smem %s0, 16, [#allocation3], [#allocation2]
  %13 = dma.done [#allocation2], 16
  %14 = sfence
  $region1: #{tpu_custom_call.1} parent=0
    #allocation4 [shape = 'u8[4096]{0}', space=vmem, size = 0x1000, scoped, tag = 'input window, operand 1, single buffered']
    #allocation5 [shape = 's32[1]{0}', space=sflag, size = 0x4, scoped, tag = 'scoped memory for tpu_custom_call.1']
    #allocation6 [shape = 's32[1]{0}', space=sflag, size = 0x4, scoped, tag = 'scoped memory for tpu_custom_call.1']
    #allocation7 [shape = 'u8[4096]{0}', space=vmem, size = 0x1000, scoped, tag = 'output window, operand 0, single buffered']
    %15 = vsyncpa [#allocation5], 0
    %16 = vsyncpa [#allocation6], 0
    // Predicated region
    $region2: #{tpu_custom_call.1} parent=1 // pred_check
      _
    $region3: #{tpu_custom_call.1} parent=1 // pred_check_branch
      %18 = sbr.rel (0) target = $region5
    $region4: #{tpu_custom_call.1} parent=1 // pred_region
      %s20 = ssub.s32 128, 128
      %21 = vsyncadd [#allocation5], %s20
      %s23 = sshll.u32 [#allocation4], 4
      %s24 = int_to_ptr.vmem [resolvable:$true] %s23
      %26 = dma.hbm_to_vmem [thread:$0]  %s1, 128, %s24, [#allocation5]
    $region5: #{tpu_custom_call.1} parent=1 // pred_fallthru
      _
    // Predicated region
    $region6: #{tpu_custom_call.1} parent=1 // pred_check
      _
    $region7: #{tpu_custom_call.1} parent=1 // pred_check_branch
      %28 = sbr.rel (0) target = $region9
    $region8: #{tpu_custom_call.1} parent=1 // pred_region
      _
    $region9: #{tpu_custom_call.1} parent=1 // pred_fallthru
      _
    // Predicated region
    $region10: #{tpu_custom_call.1} parent=1 // pred_check
      _
    $region11: #{tpu_custom_call.1} parent=1 // pred_check_branch
      %30 = sbr.rel (0) target = $region13
    $region12: #{tpu_custom_call.1} parent=1 // pred_region
      _
    $region13: #{tpu_custom_call.1} parent=1 // pred_fallthru
      _
    // Predicated region
    $region14: #{tpu_custom_call.1} parent=1 // pred_check
      _
    $region15: #{tpu_custom_call.1} parent=1 // pred_check_branch
      %32 = sbr.rel (0) target = $region17
    $region16: #{tpu_custom_call.1} parent=1 // pred_region
      _
    $region17: #{tpu_custom_call.1} parent=1 // pred_fallthru
      _
    // Predicated region
    $region18: #{tpu_custom_call.1} parent=1 // pred_check
      _
    $region19: #{tpu_custom_call.1} parent=1 // pred_check_branch
      %34 = sbr.rel (0) target = $region21
    $region20: #{tpu_custom_call.1} parent=1 // pred_region
      _
    $region21: #{tpu_custom_call.1} parent=1 // pred_fallthru
      _
    // Predicated region
    $region22: #{tpu_custom_call.1} parent=1 // pred_check
      _
    $region23: #{tpu_custom_call.1} parent=1 // pred_check_branch
      %36 = sbr.rel (0) target = $region25
    $region24: #{tpu_custom_call.1} parent=1 // pred_region
      %37 = dma.done [#allocation5], 128
    $region25: #{tpu_custom_call.1} parent=1 // pred_fallthru
      _
    %v38 = vld [vmem:[#allocation4] sm:$0xff]
    %39 = vadd.xlane.f32.xlu0 %v38
    %v40 = vpop.xlane.xlu0 %39
    %v41 = vmul.f32 %v38, %v38
    %42 = vadd.xlane.f32.xlu0 %v41
    %v43 = vpop.xlane.xlu0 %42
    %v44 = vmul.f32 %v40, 0.03125
    %v45 = vmul.f32 %v40, %v44
    %v46 = vsub.f32 %v43, %v45
    %v47 = vmul.f32 %v46, 0.032258064
    %s48 = sld [smem:[#allocation3 + $0x1]]
    %v49 = vstv %s48
    %v50 = vmul.f32 %v49, %v47
    %v51 = vld [vmem:[%s3] sm:$0x1]
    %v53 = vlaneseq
    %v54 = vshrl.u32 %v53, 7
    %v55 = vsub.s32 0, %v54
    %v56 = vrot.slane %v51, %v55
    %v58 = vadd.f32 %v50, %v56
    %v59 = vadd.f32 %v58, 1e-05
    %v60 = vrsqrt.pop %v59
    %s61 = sld [smem:[#allocation3]]
    %v62 = vstv %s61
    %v63 = vmul.f32 %v62, %v44
    %v64 = vsub.f32 %v38, %v63
    %v65 = vld [vmem:[%s2] sm:$0x1]
    %v67 = vlaneseq
    %v68 = vshrl.u32 %v67, 7
    %v69 = vsub.s32 0, %v68
    %v70 = vrot.slane %v65, %v69
    %v72 = vsub.f32 %v64, %v70
    %v73 = vmul.f32 %v72, %v60
    %v74 = vld [vmem:[%s4] sm:$0x1]
    %v76 = vlaneseq
    %v77 = vshrl.u32 %v76, 7
    %v78 = vsub.s32 0, %v77
    %v79 = vrot.slane %v74, %v78
    %v81 = vmul.f32 %v73, %v79
    %v82 = vld [vmem:[%s5] sm:$0x1]
    %v84 = vlaneseq
    %v85 = vshrl.u32 %v84, 7
    %v86 = vsub.s32 0, %v85
    %v87 = vrot.slane %v82, %v86
    %v89 = vadd.f32 %v81, %v87
    %90 = vst [vmem:[#allocation7] sm:$0xff] %v89
    // Predicated region
    $region26: #{tpu_custom_call.1} parent=1 // pred_check
      _
    $region27: #{tpu_custom_call.1} parent=1 // pred_check_branch
      %92 = sbr.rel (0) target = $region29
    $region28: #{tpu_custom_call.1} parent=1 // pred_region
      %s94 = ssub.s32 128, 128
      %95 = vsyncadd [#allocation6], %s94
      %s97 = sshll.u32 [#allocation7], 4
      %s98 = int_to_ptr.vmem [resolvable:$true] %s97
      %100 = dma.vmem_to_hbm [thread:$0]  %s98, 128, %s6, [#allocation6]
    $region29: #{tpu_custom_call.1} parent=1 // pred_fallthru
      _
    // Predicated region
    $region30: #{tpu_custom_call.1} parent=1 // pred_check
      _
    $region31: #{tpu_custom_call.1} parent=1 // pred_check_branch
      %102 = sbr.rel (0) target = $region33
    $region32: #{tpu_custom_call.1} parent=1 // pred_region
      %103 = dma.done [#allocation6], 128
    $region33: #{tpu_custom_call.1} parent=1 // pred_fallthru
      _
    %104 = vsyncpa [#allocation5], 1
    %105 = vsyncpa [#allocation6], 1

</llo_original>
